<compile_context>
chip_gen: v7x
topology: tpu7x:2x2x1
jax: 0.10.0
libtpu: 0.0.40
codegen_flags: <defaults>
</compile_context>

<pallas_src>
import jax
import jax.numpy as jnp
import numpy as np
from jax.experimental import pallas as pl
from jax.experimental.pallas import tpu as pltpu


def _round_up(x, m):
    return ((x + m - 1) // m) * m


def _pad2(a, rows, cols):
    r, c = a.shape
    return jnp.pad(a, ((0, rows - r), (0, cols - c)))


# ---------------------------------------------------------------------------
# Kernel 1: per-edge attention, one pass over edges (hoisted out of the
# aggregation loop).  neighbor = sigmoid(sum(head*w_head + rel*w_rel) + b)*tail
# ---------------------------------------------------------------------------
def kgat_attention_kernel(head_ref, tail_ref, rel_ref,
                          w_head_ref, w_rel_ref, att_b_ref, neighbor_ref):
    # VPU multiply + XLU row-reduce (no width-1 MXU matmul, no transposes).
    scores = jnp.sum(head_ref[...] * w_head_ref[...]
                     + rel_ref[...] * w_rel_ref[...],
                     axis=-1, keepdims=True) + att_b_ref[0, 0]      # (TE, 1)
    att = jax.nn.sigmoid(scores)
    neighbor_ref[...] = (att * tail_ref[...]).astype(neighbor_ref.dtype)


# ---------------------------------------------------------------------------
# Kernel 2: CSR scatter-add aggregation + output projection.
#   grid = (entity tiles, edge blocks owned by this entity tile)
#   out_ref (f32) is the resident accumulator across the edge axis.
# ---------------------------------------------------------------------------
def kgat_aggregate_kernel(blk_tbl_ref, n_blk_ref,       # scalar prefetch (SMEM)
                          head_idx_ref, neighbor_ref,   # (1,TE) i32, (TE,Dp)
                          Wt_ref, Wb_ref,               # (Dp,Dp), (1,Dp)
                          out_ref):                     # (TN,Dp) f32 resident
    del blk_tbl_ref                                     # only used in index_maps
    i = pl.program_id(0)
    k = pl.program_id(1)

    @pl.when(k == 0)
    def _():
        out_ref[...] = jnp.zeros_like(out_ref)

    @pl.when(k < n_blk_ref[i])
    def _():
        tn = out_ref.shape[0]
        te = neighbor_ref.shape[0]
        # Local head ids for this entity tile: a single (1, TE) integer
        # subtract instead of adding row_base into the full (TN, TE) iota.
        head_local = head_idx_ref[...] - i * tn                      # (1, TE)
        rows = jax.lax.broadcasted_iota(jnp.int32, (tn, te), 0)      # (TN, TE)
        onehot = jnp.where(rows == head_local,
                           jnp.ones((), neighbor_ref.dtype),
                           jnp.zeros((), neighbor_ref.dtype))        # bf16
        # bf16 x bf16 MXU matmul, f32 accumulation into the resident output.
        out_ref[...] += jnp.dot(onehot, neighbor_ref[...],
                                preferred_element_type=jnp.float32)

    @pl.when(k == pl.num_programs(1) - 1)
    def _():
        out_ref[...] = jnp.tanh(
            jnp.dot(out_ref[...], Wt_ref[...],
                    preferred_element_type=jnp.float32) + Wb_ref[...])


def kgat_forward(edge_index, edge_type, params, *, tn=512, te=2048,
                 aggregate_dtype=jnp.bfloat16):
    """Embedding gathers + edge sort in XLA; tiled hot path in Pallas."""
    entity_emb = params["entity_emb"]      # (N, D)
    relation_emb = params["relation_emb"]  # (R, D)
    N, D = entity_emb.shape
    E = edge_index.shape[1]

    d_pad = _round_up(D, 128)                              # lane-dense features
    tn = min(_round_up(tn, 128), _round_up(N, 128))
    te = min(_round_up(te, 128), _round_up(E, 128))
    n_pad = _round_up(N, tn)
    e_pad = _round_up(E, te)
    n_tiles = n_pad // tn
    total_blocks = e_pad // te

    # ---- CSR-style ordering: sort edges by head id -------------------------
    head_ids = edge_index[0].astype(jnp.int32)
    order = jnp.argsort(head_ids)
    head_sorted = head_ids[order]
    tail_sorted = edge_index[1].astype(jnp.int32)[order]
    rel_sorted = edge_type.astype(jnp.int32)[order]

    # Embedding gathers (lookups) in XLA.
    head = jnp.take(entity_emb, head_sorted, axis=0)       # (E, D)
    tail = jnp.take(entity_emb, tail_sorted, axis=0)       # (E, D)
    rel = jnp.take(relation_emb, rel_sorted, axis=0)       # (E, D)

    head = _pad2(head, e_pad, d_pad)
    tail = _pad2(tail, e_pad, d_pad)
    rel = _pad2(rel, e_pad, d_pad)

    # Padded edges: head id = n_pad (matches no entity row), tail = 0.
    head_idx = jnp.full((1, e_pad), jnp.int32(n_pad), jnp.int32)
    head_idx = head_idx.at[0, :E].set(head_sorted)

    # ---- per-entity-tile edge-block ranges (scalar prefetch tables) --------
    try:
        hs = np.asarray(jax.device_get(head_sorted)).astype(np.int64)
        bounds = np.arange(n_tiles + 1, dtype=np.int64) * tn
        lo = np.searchsorted(hs, bounds[:-1], side="left")
        hi = np.searchsorted(hs, bounds[1:], side="left")
        blk_start = lo // te
        blk_last = np.maximum(hi - 1, lo) // te
        n_blk_np = np.where(hi > lo, blk_last - blk_start + 1, 0).astype(np.int32)
        max_blocks = int(max(int(n_blk_np.max()) if n_blk_np.size else 0, 1))
        blk_tbl_np = np.minimum(
            blk_start[:, None] + np.arange(max_blocks)[None, :],
            total_blocks - 1).astype(np.int32)
    except Exception:
        # Traced edge inputs (e.g. under jit): fall back to a dense edge sweep;
        # the in-kernel mask keeps the result correct.
        max_blocks = total_blocks
        n_blk_np = np.full((n_tiles,), total_blocks, np.int32)
        blk_tbl_np = np.tile(np.arange(total_blocks, dtype=np.int32),
                             (n_tiles, 1))
    blk_tbl = jnp.asarray(blk_tbl_np.reshape(-1), jnp.int32)   # flat 1-D table
    n_blk = jnp.asarray(n_blk_np, jnp.int32)

    # ---- weights: split attention vector, pre-transpose W ------------------
    att_w = params["att_w"]                                 # (1, 2D)
    w_head = _pad2(att_w[:, :D].astype(jnp.float32), 1, d_pad)
    w_rel = _pad2(att_w[:, D:].astype(jnp.float32), 1, d_pad)
    att_b = params["att_b"].reshape(1, 1).astype(jnp.float32)
    Wt = _pad2(params["W"].T.astype(jnp.float32), d_pad, d_pad)   # y = x @ Wt + b
    Wb = _pad2(params["Wb"].astype(jnp.float32), 1, d_pad)

    nb = jnp.dtype(aggregate_dtype).itemsize

    # ---- pass 1: attention / neighbor (one pass over all edges) ------------
    att_vmem = (2 * 3 * te * d_pad * 4        # head/tail/rel double-buffered
                + 2 * te * d_pad * nb         # neighbor output
                + 4 * 4 * d_pad)              # w_head/w_rel
    att_limit = int(min(48 * 1024 * 1024, max(2 * att_vmem, 16 * 1024 * 1024)))

    c1 = lambda k: (0, 0)
    neighbor = pl.pallas_call(
        kgat_attention_kernel,
        out_shape=jax.ShapeDtypeStruct((e_pad, d_pad), aggregate_dtype),
        grid_spec=pltpu.PrefetchScalarGridSpec(
            num_scalar_prefetch=0,
            grid=(e_pad // te,),
            in_specs=[
                pl.BlockSpec((te, d_pad), lambda k: (k, 0)),     # head
                pl.BlockSpec((te, d_pad), lambda k: (k, 0)),     # tail
                pl.BlockSpec((te, d_pad), lambda k: (k, 0)),     # rel
                pl.BlockSpec((1, d_pad), c1),                    # w_head
                pl.BlockSpec((1, d_pad), c1),                    # w_rel
                pl.BlockSpec((1, 1), c1,
                             memory_space=pltpu.MemorySpace.SMEM),  # att_b
            ],
            out_specs=pl.BlockSpec((te, d_pad), lambda k: (k, 0)),
        ),
        compiler_params=pltpu.CompilerParams(
            dimension_semantics=("parallel",),
            vmem_limit_bytes=att_limit),
    )(head, tail, rel, w_head, w_rel, att_b)

    # ---- pass 2: CSR scatter-add + tanh(aggr @ W^T + b) ---------------------
    agg_vmem = (2 * (te * 4 + te * d_pad * nb)          # head_idx + neighbor
                + 2 * (d_pad * d_pad * 4 + d_pad * 4)   # Wt + Wb double-buffers
                + 2 * tn * d_pad * 4                    # resident output block
                + tn * te * nb                          # one-hot transient
                + tn * d_pad * 4)                       # finalize matmul temp
    # Capped at 48 MiB so the config also fits v7x's 64 MiB VMEM; on v5e/v6e
    # (128 MiB parts) this cap can be raised toward ~100 MiB for huge tiles.
    agg_limit = int(min(48 * 1024 * 1024, max(2 * agg_vmem, 16 * 1024 * 1024)))

    c2 = lambda i, k, tbl, nbk: (0, 0)
    grid_spec = pltpu.PrefetchScalarGridSpec(
        num_scalar_prefetch=2,
        grid=(n_tiles, max_blocks),
        in_specs=[
            pl.BlockSpec((1, te),
                         lambda i, k, tbl, nbk: (0, tbl[i * max_blocks + k])),
            pl.BlockSpec((te, d_pad),
                         lambda i, k, tbl, nbk: (tbl[i * max_blocks + k], 0)),
            pl.BlockSpec((d_pad, d_pad), c2),            # W^T
            pl.BlockSpec((1, d_pad), c2),                # Wb
        ],
        out_specs=pl.BlockSpec((tn, d_pad), lambda i, k, tbl, nbk: (i, 0)),
    )

    out_full = pl.pallas_call(
        kgat_aggregate_kernel,
        out_shape=jax.ShapeDtypeStruct((n_pad, d_pad), jnp.float32),
        grid_spec=grid_spec,
        compiler_params=pltpu.CompilerParams(
            dimension_semantics=("parallel", "arbitrary"),
            vmem_limit_bytes=agg_limit),
    )(blk_tbl, n_blk, head_idx, neighbor, Wt, Wb)

    return out_full[:N, :D]


def kgat_reference(edge_index, edge_type, params):
    """Pure-JAX reference matching the PyTorch forward (f32 throughout)."""
    entity_emb = params["entity_emb"]
    relation_emb = params["relation_emb"]
    N, D = entity_emb.shape
    head = entity_emb[edge_index[0]]
    tail = entity_emb[edge_index[1]]
    rel = relation_emb[edge_type]
    head_rel = jnp.concatenate([head, rel], axis=-1)
    att = jax.nn.sigmoid(
        jnp.dot(head_rel, params["att_w"].T,
                precision=jax.lax.Precision.HIGHEST) + params["att_b"][0])
    neighbor = att * tail
    aggr = jnp.zeros((N, D), jnp.float32).at[edge_index[0]].add(neighbor)
    return jnp.tanh(jnp.dot(aggr, params["W"].T,
                            precision=jax.lax.Precision.HIGHEST)
                    + params["Wb"][0])


if __name__ == "__main__":
    # Small synthetic shapes consistent with the module's forward.
    N_ENTITIES = 32   # users + books + authors
    N_RELATIONS = 2
    EMBED_DIM = 64
    N_EDGES = 16

    key = jax.random.PRNGKey(0)
    k = jax.random.split(key, 8)

    params = {
        "entity_emb": jax.random.normal(k[0], (N_ENTITIES, EMBED_DIM), jnp.float32),
        "relation_emb": jax.random.normal(k[1], (N_RELATIONS, EMBED_DIM), jnp.float32),
        # nn.Linear(embed_dim*2, 1): weight (1, 2D), bias (1,) -> stored (1,1)
        "att_w": 0.1 * jax.random.normal(k[2], (1, 2 * EMBED_DIM), jnp.float32),
        "att_b": 0.1 * jax.random.normal(k[3], (1, 1), jnp.float32),
        # nn.Linear(embed_dim, embed_dim): weight (D, D), bias (D,) -> (1, D)
        "W": 0.1 * jax.random.normal(k[4], (EMBED_DIM, EMBED_DIM), jnp.float32),
        "Wb": 0.1 * jax.random.normal(k[5], (1, EMBED_DIM), jnp.float32),
    }

    edge_index = jnp.stack([
        jax.random.randint(k[6], (N_EDGES,), 0, N_ENTITIES, dtype=jnp.int32),
        jax.random.randint(k[7], (N_EDGES,), 0, N_ENTITIES, dtype=jnp.int32),
    ], axis=0)                                              # (2, E)
    edge_type = jax.random.randint(jax.random.PRNGKey(1), (N_EDGES,),
                                   0, N_RELATIONS, dtype=jnp.int32)  # (E,)

    out = kgat_forward(edge_index, edge_type, params)
    out = jax.block_until_ready(out)

    ref = kgat_reference(edge_index, edge_type, params)
    assert out.shape == (N_ENTITIES, EMBED_DIM)
    # Tolerance covers the bf16 neighbor cast (~1e-2 budget, per perf review).
    assert jnp.allclose(out, ref, atol=2e-2, rtol=2e-2), "mismatch vs reference"

    print("KERNEL_OK")
</pallas_src>

<mosaic_0001>
module attributes {stable_mosaic.version = 11 : i64} {
  func.func @kgat_attention_kernel(%arg0: i32, %arg1: memref<128x128xf32, #tpu.memory_space<vmem>>, %arg2: memref<128x128xf32, #tpu.memory_space<vmem>>, %arg3: memref<128x128xf32, #tpu.memory_space<vmem>>, %arg4: memref<1x128xf32, #tpu.memory_space<vmem>>, %arg5: memref<1x128xf32, #tpu.memory_space<vmem>>, %arg6: memref<1x1xf32, #tpu.memory_space<smem>>, %arg7: memref<128x128xbf16, #tpu.memory_space<vmem>>) attributes {dimension_semantics = [#tpu.dimension_semantics<parallel>], iteration_bounds = array<i64: 1>, scalar_prefetch = 0 : i64, scratch_operands = 0 : i64, tpu.core_type = #tpu.core_type<tc>, window_params = [{transform_indices = @transform_0, window_bounds = array<i64: 128, 128>}, {transform_indices = @transform_1, window_bounds = array<i64: 128, 128>}, {transform_indices = @transform_2, window_bounds = array<i64: 128, 128>}, {pipeline_mode = #tpu.pipeline_mode<synchronous>, transform_indices = @transform_3, window_bounds = array<i64: 1, 128>}, {pipeline_mode = #tpu.pipeline_mode<synchronous>, transform_indices = @transform_4, window_bounds = array<i64: 1, 128>}, {transform_indices = @transform_5, window_bounds = array<i64: 1, 1>}, {transform_indices = @transform_6, window_bounds = array<i64: 128, 128>}]} {
    %c0 = arith.constant 0 : index
    %c0_0 = arith.constant 0 : index
    %0 = vector.load %arg1[%c0, %c0_0] : memref<128x128xf32, #tpu.memory_space<vmem>>, vector<128x128xf32>
    %c0_1 = arith.constant 0 : index
    %c0_2 = arith.constant 0 : index
    %1 = vector.load %arg4[%c0_1, %c0_2] : memref<1x128xf32, #tpu.memory_space<vmem>>, vector<1x128xf32>
    %2 = vector.broadcast %1 : vector<1x128xf32> to vector<128x128xf32>
    %3 = arith.mulf %0, %2 : vector<128x128xf32>
    %c0_3 = arith.constant 0 : index
    %c0_4 = arith.constant 0 : index
    %4 = vector.load %arg3[%c0_3, %c0_4] : memref<128x128xf32, #tpu.memory_space<vmem>>, vector<128x128xf32>
    %c0_5 = arith.constant 0 : index
    %c0_6 = arith.constant 0 : index
    %5 = vector.load %arg5[%c0_5, %c0_6] : memref<1x128xf32, #tpu.memory_space<vmem>>, vector<1x128xf32>
    %6 = vector.broadcast %5 : vector<1x128xf32> to vector<128x128xf32>
    %7 = arith.mulf %4, %6 : vector<128x128xf32>
    %8 = arith.addf %3, %7 : vector<128x128xf32>
    %cst = arith.constant dense<0.000000e+00> : vector<128xf32>
    %9 = vector.multi_reduction <add>, %8, %cst [1] : vector<128x128xf32> to vector<128xf32>
    %10 = vector.shape_cast %9 : vector<128xf32> to vector<128x1xf32>
    %c0_7 = arith.constant 0 : index
    %c0_8 = arith.constant 0 : index
    %11 = memref.load %arg6[%c0_7, %c0_8] : memref<1x1xf32, #tpu.memory_space<smem>>
    %12 = vector.broadcast %11 : f32 to vector<128x1xf32>
    %13 = arith.addf %10, %12 : vector<128x1xf32>
    %14 = arith.negf %13 : vector<128x1xf32>
    %15 = math.exp %14 : vector<128x1xf32>
    %cst_9 = arith.constant 1.000000e+00 : f32
    %16 = vector.broadcast %cst_9 : f32 to vector<128x1xf32>
    %17 = arith.addf %16, %15 : vector<128x1xf32>
    %18 = arith.divf %16, %17 : vector<128x1xf32>
    %c0_10 = arith.constant 0 : index
    %c0_11 = arith.constant 0 : index
    %19 = vector.load %arg2[%c0_10, %c0_11] : memref<128x128xf32, #tpu.memory_space<vmem>>, vector<128x128xf32>
    %20 = vector.broadcast %18 : vector<128x1xf32> to vector<128x128xf32>
    %21 = arith.mulf %20, %19 : vector<128x128xf32>
    %22 = arith.truncf %21 : vector<128x128xf32> to vector<128x128xbf16>
    %c0_12 = arith.constant 0 : index
    %c0_13 = arith.constant 0 : index
    %23 = vector.load %arg7[%c0_12, %c0_13] : memref<128x128xbf16, #tpu.memory_space<vmem>>, vector<128x128xbf16>
    tpu.vector_store %arg7[%c0_12, %c0_13], %22 {strides = array<i32>} : memref<128x128xbf16, #tpu.memory_space<vmem>>, vector<128x128xbf16>,
    return
  }
  func.func @transform_0(%arg0: i32) -> (i32, i32) {
    %c0_i32 = arith.constant 0 : i32
    %c0_i32_0 = arith.constant 0 : i32
    return %arg0, %c0_i32 : i32, i32
  }
  func.func @transform_1(%arg0: i32) -> (i32, i32) {
    %c0_i32 = arith.constant 0 : i32
    %c0_i32_0 = arith.constant 0 : i32
    return %arg0, %c0_i32 : i32, i32
  }
  func.func @transform_2(%arg0: i32) -> (i32, i32) {
    %c0_i32 = arith.constant 0 : i32
    %c0_i32_0 = arith.constant 0 : i32
    return %arg0, %c0_i32 : i32, i32
  }
  func.func @transform_3(%arg0: i32) -> (i32, i32) {
    %c0_i32 = arith.constant 0 : i32
    %c0_i32_0 = arith.constant 0 : i32
    %c0_i32_1 = arith.constant 0 : i32
    return %c0_i32, %c0_i32_0 : i32, i32
  }
  func.func @transform_4(%arg0: i32) -> (i32, i32) {
    %c0_i32 = arith.constant 0 : i32
    %c0_i32_0 = arith.constant 0 : i32
    %c0_i32_1 = arith.constant 0 : i32
    return %c0_i32, %c0_i32_0 : i32, i32
  }
  func.func @transform_5(%arg0: i32) -> (i32, i32) {
    %c0_i32 = arith.constant 0 : i32
    %c0_i32_0 = arith.constant 0 : i32
    %c0_i32_1 = arith.constant 0 : i32
    return %c0_i32, %c0_i32_0 : i32, i32
  }
  func.func @transform_6(%arg0: i32) -> (i32, i32) {
    %c0_i32 = arith.constant 0 : i32
    %c0_i32_0 = arith.constant 0 : i32
    return %arg0, %c0_i32 : i32, i32
  }
}

</mosaic_0001>

<llo_original>
// kernel: tpu_custom_call.1
$region0: #{tpu_custom_call.1}
  #allocation0 [shape = 'u32[]', space=smem, size = 0x4, offset = 0x4, fixed_abs, tag = 'smem constant byte address 0x4 - core index']
  #allocation1 [shape = 'u32[144,128]{1,0:T(1,128)}', space=vmem, size = 0x12000, scoped, tag = 'internal scratch']
  #allocation2 [shape = 'f32[1,1]{1,0:T(1,128)S(6)}', space=smem, size = 0x200, scoped, tag = 'scoped memory for tpu_custom_call.1']
  %s0 = inlined_call_operand.hbm [shape: f32[128,128], index: 0, kind: input, shape index: {}]
  %s1 = inlined_call_operand.hbm [shape: f32[128,128], index: 1, kind: input, shape index: {}]
  %s2 = inlined_call_operand.hbm [shape: f32[128,128], index: 2, kind: input, shape index: {}]
  %s3 = inlined_call_operand.vmem [shape: f32[1,128], index: 3, kind: input, shape index: {}]
  %s4 = inlined_call_operand.vmem [shape: f32[1,128], index: 4, kind: input, shape index: {}]
  %s5 = inlined_call_operand.<no memory space> [shape: f32[1,1], index: 5, kind: input, shape index: {}]
  %s6 = inlined_call_operand.hbm [shape: bf16[128,128], index: 6, kind: output, shape index: {}]
  %s7 = sld [smem:[#allocation0]]
  $region46: #{tpu_custom_call.1} parent=0
    _
  %s9 = ssub.s32 1, %s7
  %s10 = scalar_select 0, %s9, %s7
  %11 = sst [smem:[#allocation2]] %s5
  $region1: #{tpu_custom_call.1} parent=0
    #allocation3 [shape = 'u8[65536]{0}', space=vmem, size = 0x10000, scoped, tag = 'input window, operand 0, single buffered']
    #allocation4 [shape = 's32[1]{0}', space=sflag, size = 0x4, scoped, tag = 'scoped memory for tpu_custom_call.1']
    #allocation5 [shape = 's32[1]{0}', space=sflag, size = 0x4, scoped, tag = 'scoped memory for tpu_custom_call.1']
    #allocation6 [shape = 'u8[65536]{0}', space=vmem, size = 0x10000, scoped, tag = 'input window, operand 1, single buffered']
    #allocation7 [shape = 's32[1]{0}', space=sflag, size = 0x4, scoped, tag = 'scoped memory for tpu_custom_call.1']
    #allocation8 [shape = 'u8[65536]{0}', space=vmem, size = 0x10000, scoped, tag = 'input window, operand 2, single buffered']
    #allocation9 [shape = 'u8[32768]{0}', space=vmem, size = 0x8000, scoped, tag = 'output window, operand 0, single buffered']
    %12 = vsyncpa [#allocation4], 0
    %13 = vsyncpa [#allocation7], 0
    %14 = vsyncpa [#allocation5], 0
    // Predicated region
    $region2: #{tpu_custom_call.1} parent=1 // pred_check
      _
    $region3: #{tpu_custom_call.1} parent=1 // pred_check_branch
      %16 = sbr.rel (0) target = $region5
    $region4: #{tpu_custom_call.1} parent=1 // pred_region
      %s18 = ssub.s32 2048, 2048
      %19 = vsyncadd [#allocation4], %s18
      %s20 = sshll.u32 [#allocation3], 4
      %s21 = int_to_ptr.vmem [resolvable:$true] %s20
      %26 = dma.hbm_to_vmem [thread:$0]  %s0, 2048, %s21, [#allocation4], 128, 128, 8
    $region5: #{tpu_custom_call.1} parent=1 // pred_fallthru
      _
    // Predicated region
    $region6: #{tpu_custom_call.1} parent=1 // pred_check
      _
    $region7: #{tpu_custom_call.1} parent=1 // pred_check_branch
      %28 = sbr.rel (0) target = $region9
    $region8: #{tpu_custom_call.1} parent=1 // pred_region
      %s30 = ssub.s32 2048, 2048
      %31 = vsyncadd [#allocation7], %s30
      %s32 = sshll.u32 [#allocation6], 4
      %s33 = int_to_ptr.vmem [resolvable:$true] %s32
      %38 = dma.hbm_to_vmem [thread:$0]  %s1, 2048, %s33, [#allocation7], 128, 128, 8
    $region9: #{tpu_custom_call.1} parent=1 // pred_fallthru
      _
    // Predicated region
    $region10: #{tpu_custom_call.1} parent=1 // pred_check
      _
    $region11: #{tpu_custom_call.1} parent=1 // pred_check_branch
      %40 = sbr.rel (0) target = $region13
    $region12: #{tpu_custom_call.1} parent=1 // pred_region
      %s42 = ssub.s32 2048, 2048
      %43 = vsyncadd [#allocation7], %s42
      %s44 = sshll.u32 [#allocation8], 4
      %s45 = int_to_ptr.vmem [resolvable:$true] %s44
      %50 = dma.hbm_to_vmem [thread:$0]  %s2, 2048, %s45, [#allocation7], 128, 128, 8
    $region13: #{tpu_custom_call.1} parent=1 // pred_fallthru
      _
    // Predicated region
    $region14: #{tpu_custom_call.1} parent=1 // pred_check
      _
    $region15: #{tpu_custom_call.1} parent=1 // pred_check_branch
      %52 = sbr.rel (0) target = $region17
    $region16: #{tpu_custom_call.1} parent=1 // pred_region
      _
    $region17: #{tpu_custom_call.1} parent=1 // pred_fallthru
      _
    // Predicated region
    $region18: #{tpu_custom_call.1} parent=1 // pred_check
      _
    $region19: #{tpu_custom_call.1} parent=1 // pred_check_branch
      %54 = sbr.rel (0) target = $region21
    $region20: #{tpu_custom_call.1} parent=1 // pred_region
      _
    $region21: #{tpu_custom_call.1} parent=1 // pred_fallthru
      _
    // Predicated region
    $region22: #{tpu_custom_call.1} parent=1 // pred_check
      _
    $region23: #{tpu_custom_call.1} parent=1 // pred_check_branch
      %56 = sbr.rel (0) target = $region25
    $region24: #{tpu_custom_call.1} parent=1 // pred_region
      _
    $region25: #{tpu_custom_call.1} parent=1 // pred_fallthru
      _
    // Predicated region
    $region26: #{tpu_custom_call.1} parent=1 // pred_check
      _
    $region27: #{tpu_custom_call.1} parent=1 // pred_check_branch
      %58 = sbr.rel (0) target = $region29
    $region28: #{tpu_custom_call.1} parent=1 // pred_region
      %59 = dma.done [#allocation4], 2048
    $region29: #{tpu_custom_call.1} parent=1 // pred_fallthru
      _
    // Predicated region
    $region30: #{tpu_custom_call.1} parent=1 // pred_check
      _
    $region31: #{tpu_custom_call.1} parent=1 // pred_check_branch
      %61 = sbr.rel (0) target = $region33
    $region32: #{tpu_custom_call.1} parent=1 // pred_region
      %62 = dma.done [#allocation7], 2048
    $region33: #{tpu_custom_call.1} parent=1 // pred_fallthru
      _
    // Predicated region
    $region34: #{tpu_custom_call.1} parent=1 // pred_check
      _
    $region35: #{tpu_custom_call.1} parent=1 // pred_check_branch
      %64 = sbr.rel (0) target = $region37
    $region36: #{tpu_custom_call.1} parent=1 // pred_region
      %65 = dma.done [#allocation7], 2048
    $region37: #{tpu_custom_call.1} parent=1 // pred_fallthru
      _
    %v66 = vld [vmem:[#allocation3] sm:$0xff]
    %v67 = vld [vmem:[#allocation3 + $0x8] sm:$0xff]
    %v68 = vld [vmem:[#allocation3 + $0x10] sm:$0xff]
    %v69 = vld [vmem:[#allocation3 + $0x18] sm:$0xff]
    %v70 = vld [vmem:[#allocation3 + $0x20] sm:$0xff]
    %v71 = vld [vmem:[#allocation3 + $0x28] sm:$0xff]
    %v72 = vld [vmem:[#allocation3 + $0x30] sm:$0xff]
    %v73 = vld [vmem:[#allocation3 + $0x38] sm:$0xff]
    %v74 = vld [vmem:[#allocation3 + $0x40] sm:$0xff]
    %v75 = vld [vmem:[#allocation3 + $0x48] sm:$0xff]
    %v76 = vld [vmem:[#allocation3 + $0x50] sm:$0xff]
    %v77 = vld [vmem:[#allocation3 + $0x58] sm:$0xff]
    %v78 = vld [vmem:[#allocation3 + $0x60] sm:$0xff]
    %v79 = vld [vmem:[#allocation3 + $0x68] sm:$0xff]
    %v80 = vld [vmem:[#allocation3 + $0x70] sm:$0xff]
    %v81 = vld [vmem:[#allocation3 + $0x78] sm:$0xff]
    %v82 = vld [vmem:[%s3] sm:$0x1]
    %v84 = vlaneseq
    %v85 = vshrl.u32 %v84, 7
    %v86 = vsub.s32 0, %v85
    %v87 = vrot.slane %v82, %v86
    %v89 = vmul.f32 %v66, %v87
    %v90 = vmul.f32 %v67, %v87
    %v91 = vmul.f32 %v68, %v87
    %v92 = vmul.f32 %v69, %v87
    %v93 = vmul.f32 %v70, %v87
    %v94 = vmul.f32 %v71, %v87
    %v95 = vmul.f32 %v72, %v87
    %v96 = vmul.f32 %v73, %v87
    %v97 = vmul.f32 %v74, %v87
    %v98 = vmul.f32 %v75, %v87
    %v99 = vmul.f32 %v76, %v87
    %v100 = vmul.f32 %v77, %v87
    %v101 = vmul.f32 %v78, %v87
    %v102 = vmul.f32 %v79, %v87
    %v103 = vmul.f32 %v80, %v87
    %v104 = vmul.f32 %v81, %v87
    %v105 = vld [vmem:[#allocation8] sm:$0xff]
    %v106 = vld [vmem:[#allocation8 + $0x8] sm:$0xff]
    %v107 = vld [vmem:[#allocation8 + $0x10] sm:$0xff]
    %v108 = vld [vmem:[#allocation8 + $0x18] sm:$0xff]
    %v109 = vld [vmem:[#allocation8 + $0x20] sm:$0xff]
    %v110 = vld [vmem:[#allocation8 + $0x28] sm:$0xff]
    %v111 = vld [vmem:[#allocation8 + $0x30] sm:$0xff]
    %v112 = vld [vmem:[#allocation8 + $0x38] sm:$0xff]
    %v113 = vld [vmem:[#allocation8 + $0x40] sm:$0xff]
    %v114 = vld [vmem:[#allocation8 + $0x48] sm:$0xff]
    %v115 = vld [vmem:[#allocation8 + $0x50] sm:$0xff]
    %v116 = vld [vmem:[#allocation8 + $0x58] sm:$0xff]
    %v117 = vld [vmem:[#allocation8 + $0x60] sm:$0xff]
    %v118 = vld [vmem:[#allocation8 + $0x68] sm:$0xff]
    %v119 = vld [vmem:[#allocation8 + $0x70] sm:$0xff]
    %v120 = vld [vmem:[#allocation8 + $0x78] sm:$0xff]
    %v121 = vld [vmem:[%s4] sm:$0x1]
    %v123 = vlaneseq
    %v124 = vshrl.u32 %v123, 7
    %v125 = vsub.s32 0, %v124
    %v126 = vrot.slane %v121, %v125
    %v128 = vmul.f32 %v105, %v126
    %v129 = vmul.f32 %v106, %v126
    %v130 = vmul.f32 %v107, %v126
    %v131 = vmul.f32 %v108, %v126
    %v132 = vmul.f32 %v109, %v126
    %v133 = vmul.f32 %v110, %v126
    %v134 = vmul.f32 %v111, %v126
    %v135 = vmul.f32 %v112, %v126
    %v136 = vmul.f32 %v113, %v126
    %v137 = vmul.f32 %v114, %v126
    %v138 = vmul.f32 %v115, %v126
    %v139 = vmul.f32 %v116, %v126
    %v140 = vmul.f32 %v117, %v126
    %v141 = vmul.f32 %v118, %v126
    %v142 = vmul.f32 %v119, %v126
    %v143 = vmul.f32 %v120, %v126
    %v144 = vadd.f32 %v89, %v128
    %v145 = vadd.f32 %v90, %v129
    %v146 = vadd.f32 %v91, %v130
    %v147 = vadd.f32 %v92, %v131
    %v148 = vadd.f32 %v93, %v132
    %v149 = vadd.f32 %v94, %v133
    %v150 = vadd.f32 %v95, %v134
    %v151 = vadd.f32 %v96, %v135
    %v152 = vadd.f32 %v97, %v136
    %v153 = vadd.f32 %v98, %v137
    %v154 = vadd.f32 %v99, %v138
    %v155 = vadd.f32 %v100, %v139
    %v156 = vadd.f32 %v101, %v140
    %v157 = vadd.f32 %v102, %v141
    %v158 = vadd.f32 %v103, %v142
    %v159 = vadd.f32 %v104, %v143
    %160 = vadd.xlane.f32.xlu0 %v144
    %v161 = vpop.xlane.xlu0 %160
    %162 = vadd.xlane.f32.xlu0 %v145
    %v163 = vpop.xlane.xlu0 %162
    %164 = vadd.xlane.f32.xlu0 %v146
    %v165 = vpop.xlane.xlu0 %164
    %166 = vadd.xlane.f32.xlu0 %v147
    %v167 = vpop.xlane.xlu0 %166
    %168 = vadd.xlane.f32.xlu0 %v148
    %v169 = vpop.xlane.xlu0 %168
    %170 = vadd.xlane.f32.xlu0 %v149
    %v171 = vpop.xlane.xlu0 %170
    %172 = vadd.xlane.f32.xlu0 %v150
    %v173 = vpop.xlane.xlu0 %172
    %174 = vadd.xlane.f32.xlu0 %v151
    %v175 = vpop.xlane.xlu0 %174
    %176 = vadd.xlane.f32.xlu0 %v152
    %v177 = vpop.xlane.xlu0 %176
    %178 = vadd.xlane.f32.xlu0 %v153
    %v179 = vpop.xlane.xlu0 %178
    %180 = vadd.xlane.f32.xlu0 %v154
    %v181 = vpop.xlane.xlu0 %180
    %182 = vadd.xlane.f32.xlu0 %v155
    %v183 = vpop.xlane.xlu0 %182
    %184 = vadd.xlane.f32.xlu0 %v156
    %v185 = vpop.xlane.xlu0 %184
    %186 = vadd.xlane.f32.xlu0 %v157
    %v187 = vpop.xlane.xlu0 %186
    %188 = vadd.xlane.f32.xlu0 %v158
    %v189 = vpop.xlane.xlu0 %188
    %190 = vadd.xlane.f32.xlu0 %v159
    %v191 = vpop.xlane.xlu0 %190
    %s192 = sld [smem:[#allocation2]]
    %v193 = vstv %s192
    %v194 = vadd.f32 %v161, %v193
    %v195 = vadd.f32 %v163, %v193
    %v196 = vadd.f32 %v165, %v193
    %v197 = vadd.f32 %v167, %v193
    %v198 = vadd.f32 %v169, %v193
    %v199 = vadd.f32 %v171, %v193
    %v200 = vadd.f32 %v173, %v193
    %v201 = vadd.f32 %v175, %v193
    %v202 = vadd.f32 %v177, %v193
    %v203 = vadd.f32 %v179, %v193
    %v204 = vadd.f32 %v181, %v193
    %v205 = vadd.f32 %v183, %v193
    %v206 = vadd.f32 %v185, %v193
    %v207 = vadd.f32 %v187, %v193
    %v208 = vadd.f32 %v189, %v193
    %v209 = vadd.f32 %v191, %v193
    %v210 = vxor.u32 %v194, 2147483648
    %v211 = vxor.u32 %v195, 2147483648
    %v212 = vxor.u32 %v196, 2147483648
    %v213 = vxor.u32 %v197, 2147483648
    %v214 = vxor.u32 %v198, 2147483648
    %v215 = vxor.u32 %v199, 2147483648
    %v216 = vxor.u32 %v200, 2147483648
    %v217 = vxor.u32 %v201, 2147483648
    %v218 = vxor.u32 %v202, 2147483648
    %v219 = vxor.u32 %v203, 2147483648
    %v220 = vxor.u32 %v204, 2147483648
    %v221 = vxor.u32 %v205, 2147483648
    %v222 = vxor.u32 %v206, 2147483648
    %v223 = vxor.u32 %v207, 2147483648
    %v224 = vxor.u32 %v208, 2147483648
    %v225 = vxor.u32 %v209, 2147483648
    %v226 = vmul.f32 %v210, 1.442695
    %v227 = vpow.pop %v226
    %v228 = vmul.f32 %v211, 1.442695
    %v229 = vpow.pop %v228
    %v230 = vmul.f32 %v212, 1.442695
    %v231 = vpow.pop %v230
    %v232 = vmul.f32 %v213, 1.442695
    %v233 = vpow.pop %v232
    %v234 = vmul.f32 %v214, 1.442695
    %v235 = vpow.pop %v234
    %v236 = vmul.f32 %v215, 1.442695
    %v237 = vpow.pop %v236
    %v238 = vmul.f32 %v216, 1.442695
    %v239 = vpow.pop %v238
    %v240 = vmul.f32 %v217, 1.442695
    %v241 = vpow.pop %v240
    %v242 = vmul.f32 %v218, 1.442695
    %v243 = vpow.pop %v242
    %v244 = vmul.f32 %v219, 1.442695
    %v245 = vpow.pop %v244
    %v246 = vmul.f32 %v220, 1.442695
    %v247 = vpow.pop %v246
    %v248 = vmul.f32 %v221, 1.442695
    %v249 = vpow.pop %v248
    %v250 = vmul.f32 %v222, 1.442695
    %v251 = vpow.pop %v250
    %v252 = vmul.f32 %v223, 1.442695
    %v253 = vpow.pop %v252
    %v254 = vmul.f32 %v224, 1.442695
    %v255 = vpow.pop %v254
    %v256 = vmul.f32 %v225, 1.442695
    %v257 = vpow.pop %v256
    %v258 = vadd.f32 %v227, 1.0
    %v259 = vadd.f32 %v229, 1.0
    %v260 = vadd.f32 %v231, 1.0
    %v261 = vadd.f32 %v233, 1.0
    %v262 = vadd.f32 %v235, 1.0
    %v263 = vadd.f32 %v237, 1.0
    %v264 = vadd.f32 %v239, 1.0
    %v265 = vadd.f32 %v241, 1.0
    %v266 = vadd.f32 %v243, 1.0
    %v267 = vadd.f32 %v245, 1.0
    %v268 = vadd.f32 %v247, 1.0
    %v269 = vadd.f32 %v249, 1.0
    %v270 = vadd.f32 %v251, 1.0
    %v271 = vadd.f32 %v253, 1.0
    %v272 = vadd.f32 %v255, 1.0
    %v273 = vadd.f32 %v257, 1.0
    %v274 = vrcp.pop %v258
    %v275 = vmul.f32 1.0, %v274
    %v276 = vrcp.pop %v259
    %v277 = vmul.f32 1.0, %v276
    %v278 = vrcp.pop %v260
    %v279 = vmul.f32 1.0, %v278
    %v280 = vrcp.pop %v261
    %v281 = vmul.f32 1.0, %v280
    %v282 = vrcp.pop %v262
    %v283 = vmul.f32 1.0, %v282
    %v284 = vrcp.pop %v263
    %v285 = vmul.f32 1.0, %v284
    %v286 = vrcp.pop %v264
    %v287 = vmul.f32 1.0, %v286
    %v288 = vrcp.pop %v265
    %v289 = vmul.f32 1.0, %v288
    %v290 = vrcp.pop %v266
    %v291 = vmul.f32 1.0, %v290
    %v292 = vrcp.pop %v267
    %v293 = vmul.f32 1.0, %v292
    %v294 = vrcp.pop %v268
    %v295 = vmul.f32 1.0, %v294
    %v296 = vrcp.pop %v269
    %v297 = vmul.f32 1.0, %v296
    %v298 = vrcp.pop %v270
    %v299 = vmul.f32 1.0, %v298
    %v300 = vrcp.pop %v271
    %v301 = vmul.f32 1.0, %v300
    %v302 = vrcp.pop %v272
    %v303 = vmul.f32 1.0, %v302
    %v304 = vrcp.pop %v273
    %v305 = vmul.f32 1.0, %v304
    %v306 = vld [vmem:[#allocation6] sm:$0xff]
    %v307 = vld [vmem:[#allocation6 + $0x8] sm:$0xff]
    %v308 = vld [vmem:[#allocation6 + $0x10] sm:$0xff]
    %v309 = vld [vmem:[#allocation6 + $0x18] sm:$0xff]
    %v310 = vld [vmem:[#allocation6 + $0x20] sm:$0xff]
    %v311 = vld [vmem:[#allocation6 + $0x28] sm:$0xff]
    %v312 = vld [vmem:[#allocation6 + $0x30] sm:$0xff]
    %v313 = vld [vmem:[#allocation6 + $0x38] sm:$0xff]
    %v314 = vld [vmem:[#allocation6 + $0x40] sm:$0xff]
    %v315 = vld [vmem:[#allocation6 + $0x48] sm:$0xff]
    %v316 = vld [vmem:[#allocation6 + $0x50] sm:$0xff]
    %v317 = vld [vmem:[#allocation6 + $0x58] sm:$0xff]
    %v318 = vld [vmem:[#allocation6 + $0x60] sm:$0xff]
    %v319 = vld [vmem:[#allocation6 + $0x68] sm:$0xff]
    %v320 = vld [vmem:[#allocation6 + $0x70] sm:$0xff]
    %v321 = vld [vmem:[#allocation6 + $0x78] sm:$0xff]
    %v322 = vmul.f32 %v275, %v306
    %v323 = vmul.f32 %v277, %v307
    %v324 = vmul.f32 %v279, %v308
    %v325 = vmul.f32 %v281, %v309
    %v326 = vmul.f32 %v283, %v310
    %v327 = vmul.f32 %v285, %v311
    %v328 = vmul.f32 %v287, %v312
    %v329 = vmul.f32 %v289, %v313
    %v330 = vmul.f32 %v291, %v314
    %v331 = vmul.f32 %v293, %v315
    %v332 = vmul.f32 %v295, %v316
    %v333 = vmul.f32 %v297, %v317
    %v334 = vmul.f32 %v299, %v318
    %v335 = vmul.f32 %v301, %v319
    %v336 = vmul.f32 %v303, %v320
    %v337 = vmul.f32 %v305, %v321
    %v338 = vpack.c.bf16 %v323, %v322
    %v339 = vpack.c.bf16 %v325, %v324
    %v340 = vpack.c.bf16 %v327, %v326
    %v341 = vpack.c.bf16 %v329, %v328
    %v342 = vpack.c.bf16 %v331, %v330
    %v343 = vpack.c.bf16 %v333, %v332
    %v344 = vpack.c.bf16 %v335, %v334
    %v345 = vpack.c.bf16 %v337, %v336
    %v354 = vunpack.c.l.b16 %v338
    %v355 = vunpack.c.h.b16 %v338
    %v356 = vunpack.c.l.b16 %v339
    %v357 = vunpack.c.h.b16 %v339
    %v358 = vunpack.c.l.b16 %v340
    %v359 = vunpack.c.h.b16 %v340
    %v360 = vunpack.c.l.b16 %v341
    %v361 = vunpack.c.h.b16 %v341
    %v362 = vunpack.c.l.b16 %v342
    %v363 = vunpack.c.h.b16 %v342
    %v364 = vunpack.c.l.b16 %v343
    %v365 = vunpack.c.h.b16 %v343
    %v366 = vunpack.c.l.b16 %v344
    %v367 = vunpack.c.h.b16 %v344
    %v368 = vunpack.c.l.b16 %v345
    %v369 = vunpack.c.h.b16 %v345
    %v370 = vpack.c.b16 %v354, %v354
    %v371 = vpack.c.b16 %v355, %v355
    %v372 = vpack.c.b16 %v356, %v356
    %v373 = vpack.c.b16 %v357, %v357
    %v374 = vpack.c.b16 %v358, %v358
    %v375 = vpack.c.b16 %v359, %v359
    %v376 = vpack.c.b16 %v360, %v360
    %v377 = vpack.c.b16 %v361, %v361
    %v378 = vpack.c.b16 %v362, %v362
    %v379 = vpack.c.b16 %v363, %v363
    %v380 = vpack.c.b16 %v364, %v364
    %v381 = vpack.c.b16 %v365, %v365
    %v382 = vpack.c.b16 %v366, %v366
    %v383 = vpack.c.b16 %v367, %v367
    %v384 = vpack.c.b16 %v368, %v368
    %v385 = vpack.c.b16 %v369, %v369
    %402 = vst [vmem:[#allocation9] sm:$0xf] %v370
    %403 = vst [vmem:[#allocation9 + $0x4] sm:$0xf] %v371
    %404 = vst [vmem:[#allocation9 + $0x8] sm:$0xf] %v372
    %405 = vst [vmem:[#allocation9 + $0xc] sm:$0xf] %v373
    %406 = vst [vmem:[#allocation9 + $0x10] sm:$0xf] %v374
    %407 = vst [vmem:[#allocation9 + $0x14] sm:$0xf] %v375
    %408 = vst [vmem:[#allocation9 + $0x18] sm:$0xf] %v376
    %409 = vst [vmem:[#allocation9 + $0x1c] sm:$0xf] %v377
    %410 = vst [vmem:[#allocation9 + $0x20] sm:$0xf] %v378
    %411 = vst [vmem:[#allocation9 + $0x24] sm:$0xf] %v379
    %412 = vst [vmem:[#allocation9 + $0x28] sm:$0xf] %v380
    %413 = vst [vmem:[#allocation9 + $0x2c] sm:$0xf] %v381
    %414 = vst [vmem:[#allocation9 + $0x30] sm:$0xf] %v382
    %415 = vst [vmem:[#allocation9 + $0x34] sm:$0xf] %v383
    %416 = vst [vmem:[#allocation9 + $0x38] sm:$0xf] %v384
    %417 = vst [vmem:[#allocation9 + $0x3c] sm:$0xf] %v385
    // Predicated region
    $region38: #{tpu_custom_call.1} parent=1 // pred_check
      _
    $region39: #{tpu_custom_call.1} parent=1 // pred_check_branch
      %419 = sbr.rel (0) target = $region41
    $region40: #{tpu_custom_call.1} parent=1 // pred_region
      %s421 = ssub.s32 1024, 1024
      %422 = vsyncadd [#allocation5], %s421
      %s423 = sshll.u32 [#allocation9], 4
      %s424 = int_to_ptr.vmem [resolvable:$true] %s423
      %429 = dma.vmem_to_hbm [thread:$0]  %s424, 1024, %s6, [#allocation5], 64, 64, 4
    $region41: #{tpu_custom_call.1} parent=1 // pred_fallthru
      _
    // Predicated region
    $region42: #{tpu_custom_call.1} parent=1 // pred_check
      _
    $region43: #{tpu_custom_call.1} parent=1 // pred_check_branch
      %431 = sbr.rel (0) target = $region45
    $region44: #{tpu_custom_call.1} parent=1 // pred_region
      %432 = dma.done [#allocation5], 1024
    $region45: #{tpu_custom_call.1} parent=1 // pred_fallthru
      _
    %433 = vsyncpa [#allocation4], 1
    %434 = vsyncpa [#allocation7], 1
    %435 = vsyncpa [#allocation5], 1

</llo_original>
